<compile_context>
chip_gen: v7x
topology: tpu7x:2x2x1
jax: 0.10.0
libtpu: 0.0.40
codegen_flags: <defaults>
</compile_context>

<pallas_src>
import functools

import jax
import jax.numpy as jnp
from jax.experimental import pallas as pl
from jax.experimental.pallas import tpu as pltpu

_LANES = 128


def _round_up(x, m):
    return ((x + m - 1) // m) * m


def _mse_kernel(p_ref, q_ref, out_ref, *, sigmoid, tiles_per_chunk, tile_rows,
                valid_rows, need_mask):
    c = pl.program_id(0)   # chunk (parallel axis; TC shard on v7x)
    i = pl.program_id(1)   # row-tile within chunk (reduction axis)

    @pl.when(i == 0)
    def _init():
        out_ref[...] = jnp.zeros_like(out_ref)

    p = p_ref[...].astype(jnp.float32)
    q = q_ref[...].astype(jnp.float32)
    if sigmoid:
        # F.logsigmoid(x).exp() == sigmoid(x)
        p = jax.nn.sigmoid(p)
        q = jax.nn.sigmoid(q)
    d = p - q
    sq = d * d

    if need_mask:
        # Zero rows past the end of the real data: covers the partial last
        # tile and any clamped duplicate blocks when tiles don't split evenly
        # between chunks.  The mask uses the LOGICAL block id, so clamped
        # duplicates contribute exactly zero regardless of the data read.
        blk = c * tiles_per_chunk + i
        row0 = blk * tile_rows
        row_ids = jax.lax.broadcasted_iota(jnp.int32, sq.shape, 0) + row0
        sq = jnp.where(row_ids < valid_rows, sq, 0.0)

    # Fold the row tile into one vreg-shaped (8, 128) partial sum.  This stays
    # on the VPU (vreg-wise adds); the expensive cross-lane/sublane reduction
    # happens once, outside the kernel, on a tiny array.
    out_ref[...] += jnp.sum(sq.reshape(tile_rows // 8, 8, _LANES), axis=0)


def stain_consistency_loss_mse(p, q, *, sigmoid: bool = False):
    """MSE loss (mean over all elements) between p and q, optional sigmoid."""
    assert p.shape == q.shape, "p and q must have identical shapes"
    n_elems = p.size

    # Lane-dense (rows, 128) view in the ORIGINAL dtype.  ravel / reshape are
    # layout-only (no HBM copy) when n_elems % 128 == 0 (typical for NCHW).
    pf = jnp.ravel(p)
    qf = jnp.ravel(q)
    rem = n_elems % _LANES
    if rem:
        # Rare tail pad: zeros contribute 0 to the squared-diff sum even under
        # sigmoid (both sides map to 0.5).
        pad = _LANES - rem
        pf = jnp.pad(pf, (0, pad))
        qf = jnp.pad(qf, (0, pad))
    rows = pf.size // _LANES
    pf = pf.reshape(rows, _LANES)
    qf = qf.reshape(rows, _LANES)

    # ~1 MiB per input buffer; double-buffered on two inputs this is ~4 MiB of
    # VMEM, safely inside every generation's scoped default (16 MiB on v5e,
    # 32 MiB on v6e/v7x) -- no vmem_limit_bytes override needed.
    itemsize = jnp.dtype(p.dtype).itemsize
    sublane = {4: 8, 2: 16, 1: 32}.get(itemsize, 8)      # dtype packing granularity
    max_tile_rows = (1 << 20) // (_LANES * itemsize)
    tile_rows = min(max_tile_rows, _round_up(rows, sublane))

    tiles_total = pl.cdiv(rows, tile_rows)
    # Leading parallel axis of 2 chunks so the v7x megacore can split the work
    # (harmless sequential chunks on single-TC v5e/v6e).
    num_chunks = 2 if tiles_total >= 2 else 1
    tiles_per_chunk = pl.cdiv(tiles_total, num_chunks)
    covered_rows = num_chunks * tiles_per_chunk * tile_rows
    need_mask = covered_rows != rows
    last_block = tiles_total - 1

    def in_map(c, i):
        blk = c * tiles_per_chunk + i
        # Clamp logically out-of-range blocks (uneven chunk split) onto the
        # last real block; the in-kernel mask zeroes their contribution.
        return (jnp.minimum(blk, last_block), 0)

    kernel = functools.partial(
        _mse_kernel,
        sigmoid=sigmoid,
        tiles_per_chunk=tiles_per_chunk,
        tile_rows=tile_rows,
        valid_rows=rows,
        need_mask=need_mask,
    )

    partials = pl.pallas_call(
        kernel,
        out_shape=jax.ShapeDtypeStruct((num_chunks * 8, _LANES), jnp.float32),
        grid_spec=pltpu.PrefetchScalarGridSpec(
            num_scalar_prefetch=0,
            grid=(num_chunks, tiles_per_chunk),
            in_specs=[
                pl.BlockSpec((tile_rows, _LANES), in_map),
                pl.BlockSpec((tile_rows, _LANES), in_map),
            ],
            # (8,128) output block is resident across the inner axis and acts
            # as the accumulator; it is written back to HBM once per chunk.
            out_specs=pl.BlockSpec((8, _LANES), lambda c, i: (c, 0)),
        ),
        compiler_params=pltpu.CompilerParams(
            dimension_semantics=("parallel", "arbitrary"),
        ),
    )(pf, qf)

    return jnp.sum(partials) / jnp.float32(n_elems)


def _reference(p, q, sigmoid):
    pf = p.astype(jnp.float32)
    qf = q.astype(jnp.float32)
    if sigmoid:
        pf = jax.nn.sigmoid(pf)
        qf = jax.nn.sigmoid(qf)
    return jnp.mean((pf - qf) ** 2)


if __name__ == "__main__":
    key = jax.random.PRNGKey(0)

    test_shapes = [
        (2, 4, 16, 16),      # baseline tiny NCHW stain map (single tile)
        (2, 4, 128, 128),    # one large full tile, no masking
        (4, 4, 128, 144),    # two chunks + partial last tile (mask path)
    ]

    ok = True
    for shape in test_shapes:
        key, kp, kq = jax.random.split(key, 3)
        p = jax.random.normal(kp, shape, dtype=jnp.float32)
        q = jax.random.normal(kq, shape, dtype=jnp.float32)
        for sig in (False, True):
            out = stain_consistency_loss_mse(p, q, sigmoid=sig)
            out = jax.block_until_ready(out)
            ref = _reference(p, q, sig)
            if not jnp.allclose(out, ref, rtol=1e-4, atol=1e-6):
                ok = False
                print(f"MISMATCH shape={shape} sigmoid={sig}: "
                      f"kernel={out} ref={ref}")

    if ok:
        print("KERNEL_OK")
</pallas_src>

<mosaic_0001>
module attributes {stable_mosaic.version = 11 : i64} {
  func.func @_mse_kernel(%arg0: i32, %arg1: i32, %arg2: memref<16x128xf32, #tpu.memory_space<vmem>>, %arg3: memref<16x128xf32, #tpu.memory_space<vmem>>, %arg4: memref<8x128xf32, #tpu.memory_space<vmem>>) attributes {dimension_semantics = [#tpu.dimension_semantics<parallel>, #tpu.dimension_semantics<arbitrary>], iteration_bounds = array<i64: 1, 1>, scalar_prefetch = 0 : i64, scratch_operands = 0 : i64, tpu.core_type = #tpu.core_type<tc>, window_params = [{transform_indices = @transform_0, window_bounds = array<i64: 16, 128>}, {transform_indices = @transform_1, window_bounds = array<i64: 16, 128>}, {transform_indices = @transform_2, window_bounds = array<i64: 8, 128>}]} {
    %c0_i32 = arith.constant 0 : i32
    %0 = arith.cmpi eq, %arg1, %c0_i32 : i32
    %1 = arith.extui %0 : i1 to i32
    %c0_i32_0 = arith.constant 0 : i32
    %2 = arith.cmpi ne, %1, %c0_i32_0 : i32
    scf.if %2 {
      %cst_8 = arith.constant 0.000000e+00 : f32
      %12 = vector.broadcast %cst_8 : f32 to vector<8x128xf32>
      %c0_9 = arith.constant 0 : index
      %c0_10 = arith.constant 0 : index
      %13 = vector.load %arg4[%c0_9, %c0_10] : memref<8x128xf32, #tpu.memory_space<vmem>>, vector<8x128xf32>
      tpu.vector_store %arg4[%c0_9, %c0_10], %12 {strides = array<i32>} : memref<8x128xf32, #tpu.memory_space<vmem>>, vector<8x128xf32>,
    } else {
    }
    %c0 = arith.constant 0 : index
    %c0_1 = arith.constant 0 : index
    %3 = vector.load %arg2[%c0, %c0_1] : memref<16x128xf32, #tpu.memory_space<vmem>>, vector<16x128xf32>
    %c0_2 = arith.constant 0 : index
    %c0_3 = arith.constant 0 : index
    %4 = vector.load %arg3[%c0_2, %c0_3] : memref<16x128xf32, #tpu.memory_space<vmem>>, vector<16x128xf32>
    %5 = arith.subf %3, %4 : vector<16x128xf32>
    %6 = arith.mulf %5, %5 : vector<16x128xf32>
    %c0_4 = arith.constant 0 : index
    %c0_5 = arith.constant 0 : index
    %7 = vector.load %arg4[%c0_4, %c0_5] : memref<8x128xf32, #tpu.memory_space<vmem>>, vector<8x128xf32>
    %8 = vector.shape_cast %6 : vector<16x128xf32> to vector<2x8x128xf32>
    %cst = arith.constant dense<0.000000e+00> : vector<8x128xf32>
    %9 = vector.multi_reduction <add>, %8, %cst [0] : vector<2x8x128xf32> to vector<8x128xf32>
    %10 = arith.addf %7, %9 : vector<8x128xf32>
    %c0_6 = arith.constant 0 : index
    %c0_7 = arith.constant 0 : index
    %11 = vector.load %arg4[%c0_6, %c0_7] : memref<8x128xf32, #tpu.memory_space<vmem>>, vector<8x128xf32>
    tpu.vector_store %arg4[%c0_6, %c0_7], %10 {strides = array<i32>} : memref<8x128xf32, #tpu.memory_space<vmem>>, vector<8x128xf32>,
    return
  }
  func.func @transform_0(%arg0: i32, %arg1: i32) -> (i32, i32) {
    %c1_i32 = arith.constant 1 : i32
    %0 = arith.muli %arg0, %c1_i32 : i32
    %1 = arith.addi %0, %arg1 : i32
    %c0_i32 = arith.constant 0 : i32
    %2 = arith.minsi %1, %c0_i32 : i32
    %c0_i32_0 = arith.constant 0 : i32
    %c0_i32_1 = arith.constant 0 : i32
    return %2, %c0_i32_0 : i32, i32
  }
  func.func @transform_1(%arg0: i32, %arg1: i32) -> (i32, i32) {
    %c1_i32 = arith.constant 1 : i32
    %0 = arith.muli %arg0, %c1_i32 : i32
    %1 = arith.addi %0, %arg1 : i32
    %c0_i32 = arith.constant 0 : i32
    %2 = arith.minsi %1, %c0_i32 : i32
    %c0_i32_0 = arith.constant 0 : i32
    %c0_i32_1 = arith.constant 0 : i32
    return %2, %c0_i32_0 : i32, i32
  }
  func.func @transform_2(%arg0: i32, %arg1: i32) -> (i32, i32) {
    %c0_i32 = arith.constant 0 : i32
    %c0_i32_0 = arith.constant 0 : i32
    return %arg0, %c0_i32 : i32, i32
  }
}

</mosaic_0001>

<llo_original>
// kernel: tpu_custom_call.1
$region0: #{tpu_custom_call.1}
  #allocation0 [shape = 'u32[]', space=smem, size = 0x4, offset = 0x4, fixed_abs, tag = 'smem constant byte address 0x4 - core index']
  #allocation1 [shape = 'u32[144,128]{1,0:T(1,128)}', space=vmem, size = 0x12000, scoped, tag = 'internal scratch']
  %s0 = inlined_call_operand.hbm [shape: f32[16,128], index: 0, kind: input, shape index: {}]
  %s1 = inlined_call_operand.hbm [shape: f32[16,128], index: 1, kind: input, shape index: {}]
  %s2 = inlined_call_operand.hbm [shape: f32[8,128], index: 2, kind: output, shape index: {}]
  %s3 = sld [smem:[#allocation0]]
  $region30: #{tpu_custom_call.1} parent=0
    _
  %s5 = ssub.s32 1, %s3
  %s6 = scalar_select 0, %s5, %s3
  $region1: #{tpu_custom_call.1} parent=0
    #allocation2 [shape = 'u8[8192]{0}', space=vmem, size = 0x2000, scoped, tag = 'input window, operand 0, single buffered']
    #allocation3 [shape = 's32[1]{0}', space=sflag, size = 0x4, scoped, tag = 'scoped memory for tpu_custom_call.1']
    #allocation4 [shape = 's32[1]{0}', space=sflag, size = 0x4, scoped, tag = 'scoped memory for tpu_custom_call.1']
    #allocation5 [shape = 'u8[8192]{0}', space=vmem, size = 0x2000, scoped, tag = 'input window, operand 1, single buffered']
    #allocation6 [shape = 's32[1]{0}', space=sflag, size = 0x4, scoped, tag = 'scoped memory for tpu_custom_call.1']
    #allocation7 [shape = 'u8[4096]{0}', space=vmem, size = 0x1000, scoped, tag = 'output window, operand 0, single buffered']
    %7 = vsyncpa [#allocation3], 0
    %8 = vsyncpa [#allocation6], 0
    %9 = vsyncpa [#allocation4], 0
    // Predicated region
    $region2: #{tpu_custom_call.1} parent=1 // pred_check
      _
    $region3: #{tpu_custom_call.1} parent=1 // pred_check_branch
      %11 = sbr.rel (0) target = $region5
    $region4: #{tpu_custom_call.1} parent=1 // pred_region
      %s12 = sadd.s32 0, 0
      %p13 = scmp.lt.s32.totalorder %s12, 0
      %s14 = scalar_select %p13, %s12, 0
      %s15 = smul.u32 2, %s14
      %s17 = ssub.s32 256, 256
      %18 = vsyncadd [#allocation3], %s17
      %s19 = smul.addr %s15, 128
      %s20 = scalar_lea.hbm %s0, %s19
      %s21 = sshll.u32 [#allocation2], 4
      %s22 = int_to_ptr.vmem [resolvable:$true] %s21
      %27 = dma.hbm_to_vmem [thread:$0]  %s20, 256, %s22, [#allocation3], 128, 128, 8
    $region5: #{tpu_custom_call.1} parent=1 // pred_fallthru
      _
    // Predicated region
    $region6: #{tpu_custom_call.1} parent=1 // pred_check
      _
    $region7: #{tpu_custom_call.1} parent=1 // pred_check_branch
      %29 = sbr.rel (0) target = $region9
    $region8: #{tpu_custom_call.1} parent=1 // pred_region
      %s30 = sadd.s32 0, 0
      %p31 = scmp.lt.s32.totalorder %s30, 0
      %s32 = scalar_select %p31, %s30, 0
      %s33 = smul.u32 2, %s32
      %s35 = ssub.s32 256, 256
      %36 = vsyncadd [#allocation6], %s35
      %s37 = smul.addr %s33, 128
      %s38 = scalar_lea.hbm %s1, %s37
      %s39 = sshll.u32 [#allocation5], 4
      %s40 = int_to_ptr.vmem [resolvable:$true] %s39
      %45 = dma.hbm_to_vmem [thread:$0]  %s38, 256, %s40, [#allocation6], 128, 128, 8
    $region9: #{tpu_custom_call.1} parent=1 // pred_fallthru
      _
    // Predicated region
    $region10: #{tpu_custom_call.1} parent=1 // pred_check
      _
    $region11: #{tpu_custom_call.1} parent=1 // pred_check_branch
      %47 = sbr.rel (0) target = $region13
    $region12: #{tpu_custom_call.1} parent=1 // pred_region
      %48 = dma.done [#allocation3], 256
    $region13: #{tpu_custom_call.1} parent=1 // pred_fallthru
      _
    // Predicated region
    $region14: #{tpu_custom_call.1} parent=1 // pred_check
      _
    $region15: #{tpu_custom_call.1} parent=1 // pred_check_branch
      %50 = sbr.rel (0) target = $region17
    $region16: #{tpu_custom_call.1} parent=1 // pred_region
      %51 = dma.done [#allocation6], 256
    $region17: #{tpu_custom_call.1} parent=1 // pred_fallthru
      _
    %s52 = sadd.s32 0, 0
    %p53 = scmp.lt.s32.totalorder %s52, 0
    %s54 = scalar_select %p53, %s52, 0
    %s55 = smul.u32 2, %s54
    %s56 = sadd.s32 0, 0
    %p57 = scmp.lt.s32.totalorder %s56, 0
    %s58 = scalar_select %p57, %s56, 0
    %s59 = smul.u32 2, %s58
    %p60 = scmp.eq.s32.totalorder 0, 0
    // Predicated region
    $region18: #{tpu_custom_call.1} parent=1 // pred_check
      %p61 = pneg %p60
    $region19: #{tpu_custom_call.1} parent=1 // pred_check_branch
      %63 = sbr.rel (%p61) target = $region21
    $region20: #{tpu_custom_call.1} parent=1 // pred_region
      %64 = vst [vmem:[#allocation7] sm:$0xff] 0.0
    $region21: #{tpu_custom_call.1} parent=1 // pred_fallthru
      _
    %v65 = vld [vmem:[#allocation2] sm:$0xff]
    %v66 = vld [vmem:[#allocation2 + $0x8] sm:$0xff]
    %v67 = vld [vmem:[#allocation5] sm:$0xff]
    %v68 = vld [vmem:[#allocation5 + $0x8] sm:$0xff]
    %v69 = vsub.f32 %v65, %v67
    %v70 = vsub.f32 %v66, %v68
    %v71 = vmul.f32 %v69, %v69
    %v72 = vmul.f32 %v70, %v70
    %v73 = vld [vmem:[#allocation7] sm:$0xff]
    %v74 = vadd.f32 %v71, %v72
    %v75 = vadd.f32 %v73, %v74
    %76 = vst [vmem:[#allocation7] sm:$0xff] %v75
    // Predicated region
    $region22: #{tpu_custom_call.1} parent=1 // pred_check
      _
    $region23: #{tpu_custom_call.1} parent=1 // pred_check_branch
      %78 = sbr.rel (0) target = $region25
    $region24: #{tpu_custom_call.1} parent=1 // pred_region
      %s80 = ssub.s32 128, 128
      %81 = vsyncadd [#allocation4], %s80
      %s83 = sshll.u32 [#allocation7], 4
      %s84 = int_to_ptr.vmem [resolvable:$true] %s83
      %86 = dma.vmem_to_hbm [thread:$0]  %s84, 128, %s2, [#allocation4]
    $region25: #{tpu_custom_call.1} parent=1 // pred_fallthru
      _
    // Predicated region
    $region26: #{tpu_custom_call.1} parent=1 // pred_check
      _
    $region27: #{tpu_custom_call.1} parent=1 // pred_check_branch
      %88 = sbr.rel (0) target = $region29
    $region28: #{tpu_custom_call.1} parent=1 // pred_region
      %89 = dma.done [#allocation4], 128
    $region29: #{tpu_custom_call.1} parent=1 // pred_fallthru
      _
    %90 = vsyncpa [#allocation3], 1
    %91 = vsyncpa [#allocation6], 1
    %92 = vsyncpa [#allocation4], 1

</llo_original>
